<compile_context>
chip_gen: v7x
topology: tpu7x:2x2x1
jax: 0.10.0
libtpu: 0.0.40
codegen_flags: <defaults>
</compile_context>

<pallas_src>
import functools

import jax
import jax.numpy as jnp
from jax.experimental import pallas as pl
from jax.experimental.pallas import tpu as pltpu


def _policy_kernel(img_ref, lab_ref, seg_ref, w_ref, b_ref,
                   probs_ref, action_ref,
                   acc_img, acc_lab, acc_seg,
                   *, n, hidden, inv_hw):
    t = pl.program_id(0)

    @pl.when(t == 0)
    def _init():
        acc_img[...] = jnp.zeros_like(acc_img)
        acc_lab[...] = jnp.zeros_like(acc_lab)
        acc_seg[...] = jnp.zeros_like(acc_seg)

    # ---- per-tile partial spatial sums.  Cast per-tile (free VPU work hidden
    # under the DMA), accumulate in f32, lane reduction on the XLU slot.
    acc_img[...] += jnp.sum(img_ref[...].astype(jnp.float32), axis=-1, keepdims=True)
    acc_lab[...] += jnp.sum(lab_ref[...].astype(jnp.float32), axis=-1, keepdims=True)
    acc_seg[...] += jnp.sum(seg_ref[...].astype(jnp.float32), axis=-1, keepdims=True)

    # ---- finalize: projection + softmax + flat argmax, executed once.
    @pl.when(t == pl.num_programs(0) - 1)
    def _finalize():
        w = w_ref[...].astype(jnp.float32)       # (7, hidden)
        b = b_ref[...].astype(jnp.float32)       # (1, hidden)

        best_val = jnp.float32(-jnp.inf)
        best_idx = jnp.int32(0)
        for row in range(n):
            # pooled[row] = mean(x[row]) @ W + b   (tiny VPU MAC loop, no MXU)
            pooled = b                                                  # (1, hidden)
            for j in range(3):    # image channels -> w rows 0..2
                pooled = pooled + (acc_img[3 * row + j, 0] * inv_hw) * w[j:j + 1, :]
            for j in range(3):    # Lab channels   -> w rows 3..5
                pooled = pooled + (acc_lab[3 * row + j, 0] * inv_hw) * w[3 + j:4 + j, :]
            pooled = pooled + (acc_seg[row, 0] * inv_hw) * w[6:7, :]    # seg -> row 6

            # F.softmax(x, dim=1) on this row (exact division for parity).
            m = jnp.max(pooled)
            e = jnp.exp(pooled - m)
            p = e / jnp.sum(e)
            probs_ref[row:row + 1, :] = p

            # Running flat argmax (first occurrence on ties).
            pm = jnp.max(p)
            cidx = jax.lax.broadcasted_iota(jnp.int32, (1, hidden), 1)
            col = jnp.min(jnp.where(p >= pm, cidx, hidden))
            flat = jnp.int32(row * hidden) + col
            take = pm > best_val
            best_idx = jnp.where(take, flat, best_idx)
            best_val = jnp.where(take, pm, best_val)

        action_ref[0] = best_idx


def _pick_hw_tile(hw, requested=None):
    """Largest lane-aligned tile <= budget that divides H*W exactly."""
    budget = requested if requested is not None else 2048   # fits v5e/v6e/v7x scoped VMEM
    if hw <= budget:
        return hw                      # full-extent block is always legal
    tile = (budget // 128) * 128
    while tile > 128 and hw % tile != 0:
        tile -= 128
    if tile < 128 or hw % tile != 0:
        return hw                      # TODO(synk): masked remainder tiles for odd H*W
    return tile


def policy_forward(image, lab, seg, w, b, hidden_dim, hw_tile=None):
    """Eval-mode Policy.forward. Returns (action, probs) where probs are the
    Categorical distribution parameters."""
    n = image.shape[0]
    c_img, c_lab, c_seg = image.shape[1], lab.shape[1], seg.shape[1]
    cin = c_img + c_lab + c_seg
    hw = image.shape[2] * image.shape[3]

    # Free contiguous reshapes, channels folded into the sublane axis; no cast
    # (done per-tile in the kernel), no concat/transpose (no extra HBM pass).
    img2 = image.reshape(n * c_img, hw)
    lab2 = lab.reshape(n * c_lab, hw)
    seg2 = seg.reshape(n * c_seg, hw)

    tile = _pick_hw_tile(hw, hw_tile)
    num_tiles = hw // tile

    kernel = functools.partial(_policy_kernel, n=n, hidden=hidden_dim,
                               inv_hw=1.0 / float(hw))

    itemsize = jnp.dtype(image.dtype).itemsize
    cost = pl.CostEstimate(
        flops=2 * cin * n * hw + 4 * n * cin * hidden_dim,
        transcendentals=n * hidden_dim,
        bytes_accessed=cin * n * hw * itemsize + (cin + 1) * hidden_dim * 4
        + n * hidden_dim * 4 + 4,
    )

    probs, action = pl.pallas_call(
        kernel,
        out_shape=(
            jax.ShapeDtypeStruct((n, hidden_dim), jnp.float32),   # softmax probs
            jax.ShapeDtypeStruct((1,), jnp.int32),                # flat argmax
        ),
        grid=(num_tiles,),
        in_specs=[
            pl.BlockSpec((n * c_img, tile), lambda t: (0, t)),    # image (N*3, HW)
            pl.BlockSpec((n * c_lab, tile), lambda t: (0, t)),    # Lab   (N*3, HW)
            pl.BlockSpec((n * c_seg, tile), lambda t: (0, t)),    # seg   (N*1, HW)
            pl.BlockSpec((cin, hidden_dim), lambda t: (0, 0)),    # w     (7, hidden)
            pl.BlockSpec((1, hidden_dim), lambda t: (0, 0)),      # b     (1, hidden)
        ],
        out_specs=(
            pl.BlockSpec((n, hidden_dim), lambda t: (0, 0)),      # resident, written in finalize
            pl.BlockSpec(memory_space=pltpu.MemorySpace.SMEM),    # scalar action
        ),
        scratch_shapes=[
            pltpu.VMEM((n * c_img, 1), jnp.float32),              # img partial sums
            pltpu.VMEM((n * c_lab, 1), jnp.float32),              # Lab partial sums
            pltpu.VMEM((n * c_seg, 1), jnp.float32),              # seg partial sums
        ],
        compiler_params=pltpu.CompilerParams(
            dimension_semantics=("arbitrary",),                   # reduction axis
            vmem_limit_bytes=32 * 1024 * 1024,
        ),
        cost_estimate=cost,
    )(img2, lab2, seg2, w, b)
    return action[0], probs


if __name__ == "__main__":
    hidden_dim = 4      # Policy(hidden_dim=4, ...)
    N, H, W = 2, 16, 16
    c_img, c_lab, c_seg = 3, 3, 1
    cin = c_img + c_lab + c_seg

    key = jax.random.PRNGKey(0)
    k_img, k_lab, k_seg, k_w, k_b = jax.random.split(key, 5)

    image = jax.random.normal(k_img, (N, c_img, H, W), dtype=jnp.float32)
    lab = jax.random.normal(k_lab, (N, c_lab, H, W), dtype=jnp.float32)
    seg = jax.random.normal(k_seg, (N, c_seg, H, W), dtype=jnp.float32)

    # Deterministic synthetic parameters for the MSN-head stand-in (1x1 conv).
    w = 0.1 * jax.random.normal(k_w, (cin, hidden_dim), dtype=jnp.float32)
    b = 0.1 * jax.random.normal(k_b, (1, hidden_dim), dtype=jnp.float32)

    # hw_tile=128 -> 2 grid steps at this shape, exercising the accumulate +
    # finalize path of the pipelined kernel.
    action, probs = jax.block_until_ready(
        policy_forward(image, lab, seg, w, b, hidden_dim, hw_tile=128)
    )

    # Pure-JAX reference in the ORIGINAL (per-pixel project, then pool) order,
    # to validate the pool-first algebraic reorder and the tiled reduction.
    x = jnp.concatenate([image, lab, seg], axis=1)
    x2 = jnp.transpose(x, (0, 2, 3, 1)).reshape(N * H * W, cin)
    feat = x2 @ w + b
    pooled = feat.reshape(N, H * W, hidden_dim).mean(axis=1)
    probs_ref = jax.nn.softmax(pooled, axis=1)
    action_ref = jnp.argmax(probs_ref)

    assert jnp.allclose(probs, probs_ref, atol=1e-5, rtol=1e-5), "probs mismatch"
    assert int(action) == int(action_ref), "argmax mismatch"
    assert jnp.allclose(jnp.sum(probs, axis=1), 1.0, atol=1e-5), "softmax not normalized"

    print("KERNEL_OK")
</pallas_src>

<mosaic_0001>
module attributes {stable_mosaic.version = 11 : i64} {
  func.func @_policy_kernel(%arg0: i32, %arg1: memref<6x128xf32, #tpu.memory_space<vmem>>, %arg2: memref<6x128xf32, #tpu.memory_space<vmem>>, %arg3: memref<2x128xf32, #tpu.memory_space<vmem>>, %arg4: memref<7x4xf32, #tpu.memory_space<vmem>>, %arg5: memref<1x4xf32, #tpu.memory_space<vmem>>, %arg6: memref<2x4xf32, #tpu.memory_space<vmem>>, %arg7: memref<1xi32, #tpu.memory_space<smem>>, %arg8: memref<6x1xf32, #tpu.memory_space<vmem>>, %arg9: memref<6x1xf32, #tpu.memory_space<vmem>>, %arg10: memref<2x1xf32, #tpu.memory_space<vmem>>) attributes {dimension_semantics = [#tpu.dimension_semantics<arbitrary>], iteration_bounds = array<i64: 2>, scalar_prefetch = 0 : i64, scratch_operands = 3 : i64, tpu.core_type = #tpu.core_type<tc>, window_params = [{transform_indices = @transform_0, window_bounds = array<i64: 6, 128>}, {transform_indices = @transform_1, window_bounds = array<i64: 6, 128>}, {transform_indices = @transform_2, window_bounds = array<i64: 2, 128>}, {pipeline_mode = #tpu.pipeline_mode<synchronous>, transform_indices = @transform_3, window_bounds = array<i64: 7, 4>}, {pipeline_mode = #tpu.pipeline_mode<synchronous>, transform_indices = @transform_4, window_bounds = array<i64: 1, 4>}, {pipeline_mode = #tpu.pipeline_mode<synchronous>, transform_indices = @transform_5, window_bounds = array<i64: 2, 4>}, {transform_indices = @transform_6, window_bounds = array<i64: 1>}]} {
    %c0_i32 = arith.constant 0 : i32
    %0 = arith.cmpi eq, %arg0, %c0_i32 : i32
    %1 = arith.extui %0 : i1 to i32
    %c0_i32_0 = arith.constant 0 : i32
    %2 = arith.cmpi ne, %1, %c0_i32_0 : i32
    scf.if %2 {
      %cst_21 = arith.constant 0.000000e+00 : f32
      %24 = vector.broadcast %cst_21 : f32 to vector<6x1xf32>
      %c0_22 = arith.constant 0 : index
      %c0_23 = arith.constant 0 : index
      %25 = vector.load %arg8[%c0_22, %c0_23] : memref<6x1xf32, #tpu.memory_space<vmem>>, vector<6x1xf32>
      tpu.vector_store %arg8[%c0_22, %c0_23], %24 {strides = array<i32>} : memref<6x1xf32, #tpu.memory_space<vmem>>, vector<6x1xf32>,
      %cst_24 = arith.constant 0.000000e+00 : f32
      %26 = vector.broadcast %cst_24 : f32 to vector<6x1xf32>
      %c0_25 = arith.constant 0 : index
      %c0_26 = arith.constant 0 : index
      %27 = vector.load %arg9[%c0_25, %c0_26] : memref<6x1xf32, #tpu.memory_space<vmem>>, vector<6x1xf32>
      tpu.vector_store %arg9[%c0_25, %c0_26], %26 {strides = array<i32>} : memref<6x1xf32, #tpu.memory_space<vmem>>, vector<6x1xf32>,
      %cst_27 = arith.constant 0.000000e+00 : f32
      %28 = vector.broadcast %cst_27 : f32 to vector<2x1xf32>
      %c0_28 = arith.constant 0 : index
      %c0_29 = arith.constant 0 : index
      %29 = vector.load %arg10[%c0_28, %c0_29] : memref<2x1xf32, #tpu.memory_space<vmem>>, vector<2x1xf32>
      tpu.vector_store %arg10[%c0_28, %c0_29], %28 {strides = array<i32>} : memref<2x1xf32, #tpu.memory_space<vmem>>, vector<2x1xf32>,
    } else {
    }
    %c0 = arith.constant 0 : index
    %c0_1 = arith.constant 0 : index
    %3 = vector.load %arg8[%c0, %c0_1] : memref<6x1xf32, #tpu.memory_space<vmem>>, vector<6x1xf32>
    %c0_2 = arith.constant 0 : index
    %c0_3 = arith.constant 0 : index
    %4 = vector.load %arg1[%c0_2, %c0_3] : memref<6x128xf32, #tpu.memory_space<vmem>>, vector<6x128xf32>
    %cst = arith.constant dense<0.000000e+00> : vector<6xf32>
    %5 = vector.multi_reduction <add>, %4, %cst [1] : vector<6x128xf32> to vector<6xf32>
    %6 = vector.shape_cast %5 : vector<6xf32> to vector<6x1xf32>
    %7 = arith.addf %3, %6 : vector<6x1xf32>
    %c0_4 = arith.constant 0 : index
    %c0_5 = arith.constant 0 : index
    %8 = vector.load %arg8[%c0_4, %c0_5] : memref<6x1xf32, #tpu.memory_space<vmem>>, vector<6x1xf32>
    tpu.vector_store %arg8[%c0_4, %c0_5], %7 {strides = array<i32>} : memref<6x1xf32, #tpu.memory_space<vmem>>, vector<6x1xf32>,
    %c0_6 = arith.constant 0 : index
    %c0_7 = arith.constant 0 : index
    %9 = vector.load %arg9[%c0_6, %c0_7] : memref<6x1xf32, #tpu.memory_space<vmem>>, vector<6x1xf32>
    %c0_8 = arith.constant 0 : index
    %c0_9 = arith.constant 0 : index
    %10 = vector.load %arg2[%c0_8, %c0_9] : memref<6x128xf32, #tpu.memory_space<vmem>>, vector<6x128xf32>
    %cst_10 = arith.constant dense<0.000000e+00> : vector<6xf32>
    %11 = vector.multi_reduction <add>, %10, %cst_10 [1] : vector<6x128xf32> to vector<6xf32>
    %12 = vector.shape_cast %11 : vector<6xf32> to vector<6x1xf32>
    %13 = arith.addf %9, %12 : vector<6x1xf32>
    %c0_11 = arith.constant 0 : index
    %c0_12 = arith.constant 0 : index
    %14 = vector.load %arg9[%c0_11, %c0_12] : memref<6x1xf32, #tpu.memory_space<vmem>>, vector<6x1xf32>
    tpu.vector_store %arg9[%c0_11, %c0_12], %13 {strides = array<i32>} : memref<6x1xf32, #tpu.memory_space<vmem>>, vector<6x1xf32>,
    %c0_13 = arith.constant 0 : index
    %c0_14 = arith.constant 0 : index
    %15 = vector.load %arg10[%c0_13, %c0_14] : memref<2x1xf32, #tpu.memory_space<vmem>>, vector<2x1xf32>
    %c0_15 = arith.constant 0 : index
    %c0_16 = arith.constant 0 : index
    %16 = vector.load %arg3[%c0_15, %c0_16] : memref<2x128xf32, #tpu.memory_space<vmem>>, vector<2x128xf32>
    %cst_17 = arith.constant dense<0.000000e+00> : vector<2xf32>
    %17 = vector.multi_reduction <add>, %16, %cst_17 [1] : vector<2x128xf32> to vector<2xf32>
    %18 = vector.shape_cast %17 : vector<2xf32> to vector<2x1xf32>
    %19 = arith.addf %15, %18 : vector<2x1xf32>
    %c0_18 = arith.constant 0 : index
    %c0_19 = arith.constant 0 : index
    %20 = vector.load %arg10[%c0_18, %c0_19] : memref<2x1xf32, #tpu.memory_space<vmem>>, vector<2x1xf32>
    tpu.vector_store %arg10[%c0_18, %c0_19], %19 {strides = array<i32>} : memref<2x1xf32, #tpu.memory_space<vmem>>, vector<2x1xf32>,
    %c1_i32 = arith.constant 1 : i32
    %21 = arith.cmpi eq, %arg0, %c1_i32 : i32
    %22 = arith.extui %21 : i1 to i32
    %c0_i32_20 = arith.constant 0 : i32
    %23 = arith.cmpi ne, %22, %c0_i32_20 : i32
    scf.if %23 {
      %c0_21 = arith.constant 0 : index
      %c0_22 = arith.constant 0 : index
      %24 = vector.load %arg4[%c0_21, %c0_22] : memref<7x4xf32, #tpu.memory_space<vmem>>, vector<7x4xf32>
      %c0_23 = arith.constant 0 : index
      %c0_24 = arith.constant 0 : index
      %25 = vector.load %arg5[%c0_23, %c0_24] : memref<1x4xf32, #tpu.memory_space<vmem>>, vector<1x4xf32>
      %c0_25 = arith.constant 0 : index
      %c0_26 = arith.constant 0 : index
      %26 = vector.load %arg8[%c0_25, %c0_26] : memref<6x1xf32, #tpu.memory_space<vmem>>, vector<1x1xf32>
      %27 = vector.extract %26[0, 0] : f32 from vector<1x1xf32>
      %cst_27 = arith.constant 3.906250e-03 : f32
      %28 = arith.mulf %27, %cst_27 : f32
      %29 = vector.extract_strided_slice %24 {offsets = [0, 0], sizes = [1, 4], strides = [1, 1]} : vector<7x4xf32> to vector<1x4xf32>
      %30 = vector.broadcast %28 : f32 to vector<1x4xf32>
      %31 = arith.mulf %30, %29 : vector<1x4xf32>
      %32 = arith.addf %25, %31 : vector<1x4xf32>
      %c1 = arith.constant 1 : index
      %c0_28 = arith.constant 0 : index
      %33 = vector.load %arg8[%c1, %c0_28] : memref<6x1xf32, #tpu.memory_space<vmem>>, vector<1x1xf32>
      %34 = vector.extract %33[0, 0] : f32 from vector<1x1xf32>
      %cst_29 = arith.constant 3.906250e-03 : f32
      %35 = arith.mulf %34, %cst_29 : f32
      %36 = vector.extract_strided_slice %24 {offsets = [1, 0], sizes = [1, 4], strides = [1, 1]} : vector<7x4xf32> to vector<1x4xf32>
      %37 = vector.broadcast %35 : f32 to vector<1x4xf32>
      %38 = arith.mulf %37, %36 : vector<1x4xf32>
      %39 = arith.addf %32, %38 : vector<1x4xf32>
      %c2 = arith.constant 2 : index
      %c0_30 = arith.constant 0 : index
      %40 = vector.load %arg8[%c2, %c0_30] : memref<6x1xf32, #tpu.memory_space<vmem>>, vector<1x1xf32>
      %41 = vector.extract %40[0, 0] : f32 from vector<1x1xf32>
      %cst_31 = arith.constant 3.906250e-03 : f32
      %42 = arith.mulf %41, %cst_31 : f32
      %43 = vector.extract_strided_slice %24 {offsets = [2, 0], sizes = [1, 4], strides = [1, 1]} : vector<7x4xf32> to vector<1x4xf32>
      %44 = vector.broadcast %42 : f32 to vector<1x4xf32>
      %45 = arith.mulf %44, %43 : vector<1x4xf32>
      %46 = arith.addf %39, %45 : vector<1x4xf32>
      %c0_32 = arith.constant 0 : index
      %c0_33 = arith.constant 0 : index
      %47 = vector.load %arg9[%c0_32, %c0_33] : memref<6x1xf32, #tpu.memory_space<vmem>>, vector<1x1xf32>
      %48 = vector.extract %47[0, 0] : f32 from vector<1x1xf32>
      %cst_34 = arith.constant 3.906250e-03 : f32
      %49 = arith.mulf %48, %cst_34 : f32
      %50 = vector.extract_strided_slice %24 {offsets = [3, 0], sizes = [1, 4], strides = [1, 1]} : vector<7x4xf32> to vector<1x4xf32>
      %51 = vector.broadcast %49 : f32 to vector<1x4xf32>
      %52 = arith.mulf %51, %50 : vector<1x4xf32>
      %53 = arith.addf %46, %52 : vector<1x4xf32>
      %c1_35 = arith.constant 1 : index
      %c0_36 = arith.constant 0 : index
      %54 = vector.load %arg9[%c1_35, %c0_36] : memref<6x1xf32, #tpu.memory_space<vmem>>, vector<1x1xf32>
      %55 = vector.extract %54[0, 0] : f32 from vector<1x1xf32>
      %cst_37 = arith.constant 3.906250e-03 : f32
      %56 = arith.mulf %55, %cst_37 : f32
      %57 = vector.extract_strided_slice %24 {offsets = [4, 0], sizes = [1, 4], strides = [1, 1]} : vector<7x4xf32> to vector<1x4xf32>
      %58 = vector.broadcast %56 : f32 to vector<1x4xf32>
      %59 = arith.mulf %58, %57 : vector<1x4xf32>
      %60 = arith.addf %53, %59 : vector<1x4xf32>
      %c2_38 = arith.constant 2 : index
      %c0_39 = arith.constant 0 : index
      %61 = vector.load %arg9[%c2_38, %c0_39] : memref<6x1xf32, #tpu.memory_space<vmem>>, vector<1x1xf32>
      %62 = vector.extract %61[0, 0] : f32 from vector<1x1xf32>
      %cst_40 = arith.constant 3.906250e-03 : f32
      %63 = arith.mulf %62, %cst_40 : f32
      %64 = vector.extract_strided_slice %24 {offsets = [5, 0], sizes = [1, 4], strides = [1, 1]} : vector<7x4xf32> to vector<1x4xf32>
      %65 = vector.broadcast %63 : f32 to vector<1x4xf32>
      %66 = arith.mulf %65, %64 : vector<1x4xf32>
      %67 = arith.addf %60, %66 : vector<1x4xf32>
      %c0_41 = arith.constant 0 : index
      %c0_42 = arith.constant 0 : index
      %68 = vector.load %arg10[%c0_41, %c0_42] : memref<2x1xf32, #tpu.memory_space<vmem>>, vector<1x1xf32>
      %69 = vector.extract %68[0, 0] : f32 from vector<1x1xf32>
      %cst_43 = arith.constant 3.906250e-03 : f32
      %70 = arith.mulf %69, %cst_43 : f32
      %71 = vector.extract_strided_slice %24 {offsets = [6, 0], sizes = [1, 4], strides = [1, 1]} : vector<7x4xf32> to vector<1x4xf32>
      %72 = vector.broadcast %70 : f32 to vector<1x4xf32>
      %73 = arith.mulf %72, %71 : vector<1x4xf32>
      %74 = arith.addf %67, %73 : vector<1x4xf32>
      %75 = vector.shape_cast %74 : vector<1x4xf32> to vector<1x1x4xf32>
      %cst_44 = arith.constant dense<0xFF800000> : vector<1xf32>
      %76 = vector.multi_reduction <maximumf>, %75, %cst_44 [1, 2] : vector<1x1x4xf32> to vector<1xf32>
      %77 = vector.shape_cast %76 : vector<1xf32> to vector<1x1x1xf32>
      %78 = vector.extract %77[0, 0, 0] : f32 from vector<1x1x1xf32>
      %79 = vector.broadcast %78 : f32 to vector<1x4xf32>
      %80 = arith.subf %74, %79 : vector<1x4xf32>
      %81 = math.exp %80 : vector<1x4xf32>
      %82 = vector.shape_cast %81 : vector<1x4xf32> to vector<1x1x4xf32>
      %cst_45 = arith.constant dense<0.000000e+00> : vector<1xf32>
      %83 = vector.multi_reduction <add>, %82, %cst_45 [1, 2] : vector<1x1x4xf32> to vector<1xf32>
      %84 = vector.shape_cast %83 : vector<1xf32> to vector<1x1x1xf32>
      %85 = vector.extract %84[0, 0, 0] : f32 from vector<1x1x1xf32>
      %86 = vector.broadcast %85 : f32 to vector<1x4xf32>
      %87 = arith.divf %81, %86 : vector<1x4xf32>
      %c0_46 = arith.constant 0 : index
      %c0_47 = arith.constant 0 : index
      %88 = vector.load %arg6[%c0_46, %c0_47] : memref<2x4xf32, #tpu.memory_space<vmem>>, vector<1x4xf32>
      tpu.vector_store %arg6[%c0_46, %c0_47], %87 {strides = array<i32>} : memref<2x4xf32, #tpu.memory_space<vmem>>, vector<1x4xf32>,
      %89 = vector.shape_cast %87 : vector<1x4xf32> to vector<1x1x4xf32>
      %cst_48 = arith.constant dense<0xFF800000> : vector<1xf32>
      %90 = vector.multi_reduction <maximumf>, %89, %cst_48 [1, 2] : vector<1x1x4xf32> to vector<1xf32>
      %91 = vector.shape_cast %90 : vector<1xf32> to vector<1x1x1xf32>
      %92 = vector.extract %91[0, 0, 0] : f32 from vector<1x1x1xf32>
      %93 = tpu.iota {dimensions = array<i32: 1>} : vector<1x4xi32>
      %94 = vector.broadcast %92 : f32 to vector<1x4xf32>
      %95 = arith.cmpf oge, %87, %94 : vector<1x4xf32>
      %c4_i32 = arith.constant 4 : i32
      %96 = vector.broadcast %c4_i32 : i32 to vector<1x4xi32>
      %97 = arith.select %95, %93, %96 : vector<1x4xi1>, vector<1x4xi32>
      %98 = vector.shape_cast %97 : vector<1x4xi32> to vector<1x1x4xi32>
      %cst_49 = arith.constant dense<2147483647> : vector<1xi32>
      %99 = vector.multi_reduction <minsi>, %98, %cst_49 [1, 2] : vector<1x1x4xi32> to vector<1xi32>
      %100 = vector.shape_cast %99 : vector<1xi32> to vector<1x1x1xi32>
      %101 = vector.extract %100[0, 0, 0] : i32 from vector<1x1x1xi32>
      %c0_i32_50 = arith.constant 0 : i32
      %102 = arith.addi %c0_i32_50, %101 : i32
      %cst_51 = arith.constant 0xFF800000 : f32
      %103 = arith.cmpf ogt, %92, %cst_51 : f32
      %c0_i32_52 = arith.constant 0 : i32
      %104 = arith.select %103, %102, %c0_i32_52 : i32
      %cst_53 = arith.constant 0xFF800000 : f32
      %105 = arith.select %103, %92, %cst_53 : f32
      %c3 = arith.constant 3 : index
      %c0_54 = arith.constant 0 : index
      %106 = vector.load %arg8[%c3, %c0_54] : memref<6x1xf32, #tpu.memory_space<vmem>>, vector<1x1xf32>
      %107 = vector.extract %106[0, 0] : f32 from vector<1x1xf32>
      %cst_55 = arith.constant 3.906250e-03 : f32
      %108 = arith.mulf %107, %cst_55 : f32
      %109 = vector.extract_strided_slice %24 {offsets = [0, 0], sizes = [1, 4], strides = [1, 1]} : vector<7x4xf32> to vector<1x4xf32>
      %110 = vector.broadcast %108 : f32 to vector<1x4xf32>
      %111 = arith.mulf %110, %109 : vector<1x4xf32>
      %112 = arith.addf %25, %111 : vector<1x4xf32>
      %c4 = arith.constant 4 : index
      %c0_56 = arith.constant 0 : index
      %113 = vector.load %arg8[%c4, %c0_56] : memref<6x1xf32, #tpu.memory_space<vmem>>, vector<1x1xf32>
      %114 = vector.extract %113[0, 0] : f32 from vector<1x1xf32>
      %cst_57 = arith.constant 3.906250e-03 : f32
      %115 = arith.mulf %114, %cst_57 : f32
      %116 = vector.extract_strided_slice %24 {offsets = [1, 0], sizes = [1, 4], strides = [1, 1]} : vector<7x4xf32> to vector<1x4xf32>
      %117 = vector.broadcast %115 : f32 to vector<1x4xf32>
      %118 = arith.mulf %117, %116 : vector<1x4xf32>
      %119 = arith.addf %112, %118 : vector<1x4xf32>
      %c5 = arith.constant 5 : index
      %c0_58 = arith.constant 0 : index
      %120 = vector.load %arg8[%c5, %c0_58] : memref<6x1xf32, #tpu.memory_space<vmem>>, vector<1x1xf32>
      %121 = vector.extract %120[0, 0] : f32 from vector<1x1xf32>
      %cst_59 = arith.constant 3.906250e-03 : f32
      %122 = arith.mulf %121, %cst_59 : f32
      %123 = vector.extract_strided_slice %24 {offsets = [2, 0], sizes = [1, 4], strides = [1, 1]} : vector<7x4xf32> to vector<1x4xf32>
      %124 = vector.broadcast %122 : f32 to vector<1x4xf32>
      %125 = arith.mulf %124, %123 : vector<1x4xf32>
      %126 = arith.addf %119, %125 : vector<1x4xf32>
      %c3_60 = arith.constant 3 : index
      %c0_61 = arith.constant 0 : index
      %127 = vector.load %arg9[%c3_60, %c0_61] : memref<6x1xf32, #tpu.memory_space<vmem>>, vector<1x1xf32>
      %128 = vector.extract %127[0, 0] : f32 from vector<1x1xf32>
      %cst_62 = arith.constant 3.906250e-03 : f32
      %129 = arith.mulf %128, %cst_62 : f32
      %130 = vector.extract_strided_slice %24 {offsets = [3, 0], sizes = [1, 4], strides = [1, 1]} : vector<7x4xf32> to vector<1x4xf32>
      %131 = vector.broadcast %129 : f32 to vector<1x4xf32>
      %132 = arith.mulf %131, %130 : vector<1x4xf32>
      %133 = arith.addf %126, %132 : vector<1x4xf32>
      %c4_63 = arith.constant 4 : index
      %c0_64 = arith.constant 0 : index
      %134 = vector.load %arg9[%c4_63, %c0_64] : memref<6x1xf32, #tpu.memory_space<vmem>>, vector<1x1xf32>
      %135 = vector.extract %134[0, 0] : f32 from vector<1x1xf32>
      %cst_65 = arith.constant 3.906250e-03 : f32
      %136 = arith.mulf %135, %cst_65 : f32
      %137 = vector.extract_strided_slice %24 {offsets = [4, 0], sizes = [1, 4], strides = [1, 1]} : vector<7x4xf32> to vector<1x4xf32>
      %138 = vector.broadcast %136 : f32 to vector<1x4xf32>
      %139 = arith.mulf %138, %137 : vector<1x4xf32>
      %140 = arith.addf %133, %139 : vector<1x4xf32>
      %c5_66 = arith.constant 5 : index
      %c0_67 = arith.constant 0 : index
      %141 = vector.load %arg9[%c5_66, %c0_67] : memref<6x1xf32, #tpu.memory_space<vmem>>, vector<1x1xf32>
      %142 = vector.extract %141[0, 0] : f32 from vector<1x1xf32>
      %cst_68 = arith.constant 3.906250e-03 : f32
      %143 = arith.mulf %142, %cst_68 : f32
      %144 = vector.extract_strided_slice %24 {offsets = [5, 0], sizes = [1, 4], strides = [1, 1]} : vector<7x4xf32> to vector<1x4xf32>
      %145 = vector.broadcast %143 : f32 to vector<1x4xf32>
      %146 = arith.mulf %145, %144 : vector<1x4xf32>
      %147 = arith.addf %140, %146 : vector<1x4xf32>
      %c1_69 = arith.constant 1 : index
      %c0_70 = arith.constant 0 : index
      %148 = vector.load %arg10[%c1_69, %c0_70] : memref<2x1xf32, #tpu.memory_space<vmem>>, vector<1x1xf32>
      %149 = vector.extract %148[0, 0] : f32 from vector<1x1xf32>
      %cst_71 = arith.constant 3.906250e-03 : f32
      %150 = arith.mulf %149, %cst_71 : f32
      %151 = vector.extract_strided_slice %24 {offsets = [6, 0], sizes = [1, 4], strides = [1, 1]} : vector<7x4xf32> to vector<1x4xf32>
      %152 = vector.broadcast %150 : f32 to vector<1x4xf32>
      %153 = arith.mulf %152, %151 : vector<1x4xf32>
      %154 = arith.addf %147, %153 : vector<1x4xf32>
      %155 = vector.shape_cast %154 : vector<1x4xf32> to vector<1x1x4xf32>
      %cst_72 = arith.constant dense<0xFF800000> : vector<1xf32>
      %156 = vector.multi_reduction <maximumf>, %155, %cst_72 [1, 2] : vector<1x1x4xf32> to vector<1xf32>
      %157 = vector.shape_cast %156 : vector<1xf32> to vector<1x1x1xf32>
      %158 = vector.extract %157[0, 0, 0] : f32 from vector<1x1x1xf32>
      %159 = vector.broadcast %158 : f32 to vector<1x4xf32>
      %160 = arith.subf %154, %159 : vector<1x4xf32>
      %161 = math.exp %160 : vector<1x4xf32>
      %162 = vector.shape_cast %161 : vector<1x4xf32> to vector<1x1x4xf32>
      %cst_73 = arith.constant dense<0.000000e+00> : vector<1xf32>
      %163 = vector.multi_reduction <add>, %162, %cst_73 [1, 2] : vector<1x1x4xf32> to vector<1xf32>
      %164 = vector.shape_cast %163 : vector<1xf32> to vector<1x1x1xf32>
      %165 = vector.extract %164[0, 0, 0] : f32 from vector<1x1x1xf32>
      %166 = vector.broadcast %165 : f32 to vector<1x4xf32>
      %167 = arith.divf %161, %166 : vector<1x4xf32>
      %c1_74 = arith.constant 1 : index
      %c0_75 = arith.constant 0 : index
      %168 = vector.load %arg6[%c1_74, %c0_75] : memref<2x4xf32, #tpu.memory_space<vmem>>, vector<1x4xf32>
      tpu.vector_store %arg6[%c1_74, %c0_75], %167 {strides = array<i32>} : memref<2x4xf32, #tpu.memory_space<vmem>>, vector<1x4xf32>,
      %169 = vector.shape_cast %167 : vector<1x4xf32> to vector<1x1x4xf32>
      %cst_76 = arith.constant dense<0xFF800000> : vector<1xf32>
      %170 = vector.multi_reduction <maximumf>, %169, %cst_76 [1, 2] : vector<1x1x4xf32> to vector<1xf32>
      %171 = vector.shape_cast %170 : vector<1xf32> to vector<1x1x1xf32>
      %172 = vector.extract %171[0, 0, 0] : f32 from vector<1x1x1xf32>
      %173 = tpu.iota {dimensions = array<i32: 1>} : vector<1x4xi32>
      %174 = vector.broadcast %172 : f32 to vector<1x4xf32>
      %175 = arith.cmpf oge, %167, %174 : vector<1x4xf32>
      %c4_i32_77 = arith.constant 4 : i32
      %176 = vector.broadcast %c4_i32_77 : i32 to vector<1x4xi32>
      %177 = arith.select %175, %173, %176 : vector<1x4xi1>, vector<1x4xi32>
      %178 = vector.shape_cast %177 : vector<1x4xi32> to vector<1x1x4xi32>
      %cst_78 = arith.constant dense<2147483647> : vector<1xi32>
      %179 = vector.multi_reduction <minsi>, %178, %cst_78 [1, 2] : vector<1x1x4xi32> to vector<1xi32>
      %180 = vector.shape_cast %179 : vector<1xi32> to vector<1x1x1xi32>
      %181 = vector.extract %180[0, 0, 0] : i32 from vector<1x1x1xi32>
      %c4_i32_79 = arith.constant 4 : i32
      %182 = arith.addi %c4_i32_79, %181 : i32
      %183 = arith.cmpf ogt, %172, %105 : f32
      %184 = arith.select %183, %182, %104 : i32
      %c0_80 = arith.constant 0 : index
      %185 = memref.load %arg7[%c0_80] : memref<1xi32, #tpu.memory_space<smem>>
      memref.store %184, %arg7[%c0_80] : memref<1xi32, #tpu.memory_space<smem>>
    } else {
    }
    return
  }
  func.func @transform_0(%arg0: i32) -> (i32, i32) {
    %c0_i32 = arith.constant 0 : i32
    %c0_i32_0 = arith.constant 0 : i32
    return %c0_i32, %arg0 : i32, i32
  }
  func.func @transform_1(%arg0: i32) -> (i32, i32) {
    %c0_i32 = arith.constant 0 : i32
    %c0_i32_0 = arith.constant 0 : i32
    return %c0_i32, %arg0 : i32, i32
  }
  func.func @transform_2(%arg0: i32) -> (i32, i32) {
    %c0_i32 = arith.constant 0 : i32
    %c0_i32_0 = arith.constant 0 : i32
    return %c0_i32, %arg0 : i32, i32
  }
  func.func @transform_3(%arg0: i32) -> (i32, i32) {
    %c0_i32 = arith.constant 0 : i32
    %c0_i32_0 = arith.constant 0 : i32
    %c0_i32_1 = arith.constant 0 : i32
    return %c0_i32, %c0_i32_0 : i32, i32
  }
  func.func @transform_4(%arg0: i32) -> (i32, i32) {
    %c0_i32 = arith.constant 0 : i32
    %c0_i32_0 = arith.constant 0 : i32
    %c0_i32_1 = arith.constant 0 : i32
    return %c0_i32, %c0_i32_0 : i32, i32
  }
  func.func @transform_5(%arg0: i32) -> (i32, i32) {
    %c0_i32 = arith.constant 0 : i32
    %c0_i32_0 = arith.constant 0 : i32
    %c0_i32_1 = arith.constant 0 : i32
    return %c0_i32, %c0_i32_0 : i32, i32
  }
  func.func @transform_6(%arg0: i32) -> i32 {
    %c0_i32 = arith.constant 0 : i32
    %c0_i32_0 = arith.constant 0 : i32
    return %c0_i32 : i32
  }
}

</mosaic_0001>

<llo_original>
// kernel: tpu_custom_call.1
$region0: #{tpu_custom_call.1}
  #allocation0 [shape = 'u32[]', space=smem, size = 0x4, offset = 0x4, fixed_abs, tag = 'smem constant byte address 0x4 - core index']
  #allocation1 [shape = 'u32[144,128]{1,0:T(1,128)}', space=vmem, size = 0x12000, scoped, tag = 'internal scratch']
  #allocation2 [shape = 'f32[6,1]{1,0:T(8,128)}', space=vmem, size = 0x1000, scoped, tag = 'scratch operand']
  #allocation3 [shape = 'f32[6,1]{1,0:T(8,128)}', space=vmem, size = 0x1000, scoped, tag = 'scratch operand']
  #allocation4 [shape = 'f32[2,1]{1,0:T(2,128)}', space=vmem, size = 0x400, scoped, tag = 'scratch operand']
  %s0 = inlined_call_operand.hbm [shape: f32[6,256], index: 0, kind: input, shape index: {}]
  %s1 = inlined_call_operand.hbm [shape: f32[6,256], index: 1, kind: input, shape index: {}]
  %s2 = inlined_call_operand.vmem [shape: f32[2,256], index: 2, kind: input, shape index: {}]
  %s3 = inlined_call_operand.vmem [shape: f32[7,4], index: 3, kind: input, shape index: {}]
  %s4 = inlined_call_operand.vmem [shape: f32[1,4], index: 4, kind: input, shape index: {}]
  %s5 = inlined_call_operand.hbm [shape: f32[2,4], index: 5, kind: output, shape index: {0}]
  %s6 = inlined_call_operand.hbm [shape: s32[1], index: 6, kind: output, shape index: {1}]
  %7 = xla_tuple %s5, %s6
  %s8 = sld [smem:[#allocation0]]
  $region77: #{tpu_custom_call.1} parent=0
    _
  %s10 = ssub.s32 1, %s8
  %s11 = scalar_select 0, %s10, %s8
  $region1: #{tpu_custom_call.1} parent=0
    #allocation5 [shape = 'u8[8192]{0}', space=vmem, size = 0x2000, scoped, tag = 'input window, operand 0']
    #allocation6 [shape = 's32[2]{0}', space=sflag, size = 0x8, scoped, tag = 'scoped memory for tpu_custom_call.1']
    #allocation7 [shape = 's32[2]{0}', space=sflag, size = 0x8, scoped, tag = 'scoped memory for tpu_custom_call.1']
    #allocation8 [shape = 's32[2]{0}', space=sflag, size = 0x8, scoped, tag = 'scoped memory for tpu_custom_call.1']
    #allocation9 [shape = 'u8[8192]{0}', space=vmem, size = 0x2000, scoped, tag = 'input window, operand 1']
    #allocation10 [shape = 's32[2]{0}', space=sflag, size = 0x8, scoped, tag = 'scoped memory for tpu_custom_call.1']
    #allocation11 [shape = 'u8[1024]{0}', space=vmem, size = 0x400, scoped, tag = 'output window, operand 0, single buffered']
    #allocation12 [shape = 'u8[512]{0}', space=smem, size = 0x200, scoped, tag = 'output window, operand 1, single buffered']
    %12 = vsyncpa [#allocation6], 0
    %s13 = scalar_lea.sflag [#allocation6], 1
    %14 = vsyncpa %s13, 0
    %15 = vsyncpa [#allocation10], 0
    %s16 = scalar_lea.sflag [#allocation10], 1
    %17 = vsyncpa %s16, 0
    %18 = vsyncpa [#allocation7], 0
    %19 = vsyncpa [#allocation8], 0
    loop: start=0, step=1, limit=4
    $region2: #{tpu_custom_call.1} parent=1 // loop_pre_header
      _
    $region3: #{tpu_custom_call.1} parent=1 // loop_header
      %s21 = sphi 0, %s25
      %p22 = scmp.ge.s32.totalorder %s21, 4
      %s31 = sphi 0, %s33
      %s34 = sphi 0, %s31
      %s35 = sphi 0, %s34
      %s51 = sphi 0, %s35
      %s57 = sphi 0, %s59
      %s60 = sphi 0, %s57
      %s61 = sphi 0, %s60
      %s77 = sphi 0, %s61
      %s83 = sphi 0, %s85
      %s86 = sphi 0, %s83
      %s87 = sphi 0, %s86
      %s103 = sphi 0, %s87
      %s107 = sphi 0, %s107
      %s109 = sphi 0, %s107
      %s110 = sphi 0, %s109
      %s124 = sphi 0, %s110
      %s128 = sphi 0, %s128
      %s130 = sphi 0, %s128
      %s131 = sphi 0, %s130
      %s145 = sphi 0, %s131
      %s149 = sphi 0, %s149
      %s151 = sphi 0, %s149
      %s152 = sphi 0, %s151
      %s166 = sphi 0, %s152
      %s170 = sphi 0, %s170
      %s172 = sphi 0, %s170
      %s173 = sphi 0, %s172
      %s187 = sphi 0, %s173
    $region4: #{tpu_custom_call.1} parent=1 // loop_header_branch
      %24 = sbr.rel (%p22) target = $region8
    $region5: #{tpu_custom_call.1} parent=1 // loop_body
      %s26 = ssub.s32 %s21, 1
      %s27 = ssub.s32 %s21, 2
      %s28 = sadd.s32 %s21, 1
      %s29 = ssub.s32 %s21, %s28
      %p30 = scmp.eq.s32.totalorder %s29, 0
      %s32 = sadd.s32 %s31, 1
      %s33 = scalar_select %p30, %s31, %s32
      %p36 = pneg %p30
      %p37 = scmp.eq.s32.totalorder %s21, 1
      %p38 = por %p36, %p37
      %p39 = scmp.ne.s32.totalorder %s31, %s34
      %p40 = scmp.eq.s32.totalorder %s21, 0
      %p41 = por %p39, %p40
      %p42 = scmp.ne.s32.totalorder %s31, %s34
      %p43 = scmp.eq.s32.totalorder %s26, 1
      %p44 = por %p42, %p43
      %p45 = scmp.ne.s32.totalorder %s34, %s35
      %p46 = scmp.eq.s32.totalorder %s26, 0
      %p47 = por %p45, %p46
      %p48 = scmp.ne.s32.totalorder %s34, %s35
      %p49 = scmp.eq.s32.totalorder %s27, 1
      %p50 = por %p48, %p49
      %p52 = scmp.ne.s32.totalorder %s35, %s51
      %p53 = scmp.eq.s32.totalorder %s27, 0
      %p54 = por %p52, %p53
      %s55 = ssub.s32 %s21, %s28
      %p56 = scmp.eq.s32.totalorder %s55, 0
      %s58 = sadd.s32 %s57, 1
      %s59 = scalar_select %p56, %s57, %s58
      %p62 = pneg %p56
      %p63 = scmp.eq.s32.totalorder %s21, 1
      %p64 = por %p62, %p63
      %p65 = scmp.ne.s32.totalorder %s57, %s60
      %p66 = scmp.eq.s32.totalorder %s21, 0
      %p67 = por %p65, %p66
      %p68 = scmp.ne.s32.totalorder %s57, %s60
      %p69 = scmp.eq.s32.totalorder %s26, 1
      %p70 = por %p68, %p69
      %p71 = scmp.ne.s32.totalorder %s60, %s61
      %p72 = scmp.eq.s32.totalorder %s26, 0
      %p73 = por %p71, %p72
      %p74 = scmp.ne.s32.totalorder %s60, %s61
      %p75 = scmp.eq.s32.totalorder %s27, 1
      %p76 = por %p74, %p75
      %p78 = scmp.ne.s32.totalorder %s61, %s77
      %p79 = scmp.eq.s32.totalorder %s27, 0
      %p80 = por %p78, %p79
      %s81 = ssub.s32 %s21, %s28
      %p82 = scmp.eq.s32.totalorder %s81, 0
      %s84 = sadd.s32 %s83, 1
      %s85 = scalar_select %p82, %s83, %s84
      %p88 = pneg %p82
      %p89 = scmp.eq.s32.totalorder %s21, 1
      %p90 = por %p88, %p89
      %p91 = scmp.ne.s32.totalorder %s83, %s86
      %p92 = scmp.eq.s32.totalorder %s21, 0
      %p93 = por %p91, %p92
      %p94 = scmp.ne.s32.totalorder %s83, %s86
      %p95 = scmp.eq.s32.totalorder %s26, 1
      %p96 = por %p94, %p95
      %p97 = scmp.ne.s32.totalorder %s86, %s87
      %p98 = scmp.eq.s32.totalorder %s26, 0
      %p99 = por %p97, %p98
      %p100 = scmp.ne.s32.totalorder %s86, %s87
      %p101 = scmp.eq.s32.totalorder %s27, 1
      %p102 = por %p100, %p101
      %p104 = scmp.ne.s32.totalorder %s87, %s103
      %p105 = scmp.eq.s32.totalorder %s27, 0
      %p106 = por %p104, %p105
      %s108 = sadd.s32 %s107, 1
      %p111 = scmp.eq.s32.totalorder %s21, 1
      %p112 = scmp.ne.s32.totalorder %s107, %s109
      %p113 = scmp.eq.s32.totalorder %s21, 0
      %p114 = por %p112, %p113
      %p115 = scmp.ne.s32.totalorder %s107, %s109
      %p116 = scmp.eq.s32.totalorder %s26, 1
      %p117 = por %p115, %p116
      %p118 = scmp.ne.s32.totalorder %s109, %s110
      %p119 = scmp.eq.s32.totalorder %s26, 0
      %p120 = por %p118, %p119
      %p121 = scmp.ne.s32.totalorder %s109, %s110
      %p122 = scmp.eq.s32.totalorder %s27, 1
      %p123 = por %p121, %p122
      %p125 = scmp.ne.s32.totalorder %s110, %s124
      %p126 = scmp.eq.s32.totalorder %s27, 0
      %p127 = por %p125, %p126
      %s129 = sadd.s32 %s128, 1
      %p132 = scmp.eq.s32.totalorder %s21, 1
      %p133 = scmp.ne.s32.totalorder %s128, %s130
      %p134 = scmp.eq.s32.totalorder %s21, 0
      %p135 = por %p133, %p134
      %p136 = scmp.ne.s32.totalorder %s128, %s130
      %p137 = scmp.eq.s32.totalorder %s26, 1
      %p138 = por %p136, %p137
      %p139 = scmp.ne.s32.totalorder %s130, %s131
      %p140 = scmp.eq.s32.totalorder %s26, 0
      %p141 = por %p139, %p140
      %p142 = scmp.ne.s32.totalorder %s130, %s131
      %p143 = scmp.eq.s32.totalorder %s27, 1
      %p144 = por %p142, %p143
      %p146 = scmp.ne.s32.totalorder %s131, %s145
      %p147 = scmp.eq.s32.totalorder %s27, 0
      %p148 = por %p146, %p147
      %s150 = sadd.s32 %s149, 1
      %p153 = scmp.eq.s32.totalorder %s21, 1
      %p154 = scmp.ne.s32.totalorder %s149, %s151
      %p155 = scmp.eq.s32.totalorder %s21, 0
      %p156 = por %p154, %p155
      %p157 = scmp.ne.s32.totalorder %s149, %s151
      %p158 = scmp.eq.s32.totalorder %s26, 1
      %p159 = por %p157, %p158
      %p160 = scmp.ne.s32.totalorder %s151, %s152
      %p161 = scmp.eq.s32.totalorder %s26, 0
      %p162 = por %p160, %p161
      %p163 = scmp.ne.s32.totalorder %s151, %s152
      %p164 = scmp.eq.s32.totalorder %s27, 1
      %p165 = por %p163, %p164
      %p167 = scmp.ne.s32.totalorder %s152, %s166
      %p168 = scmp.eq.s32.totalorder %s27, 0
      %p169 = por %p167, %p168
      %s171 = sadd.s32 %s170, 1
      %p174 = scmp.eq.s32.totalorder %s21, 1
      %p175 = scmp.ne.s32.totalorder %s170, %s172
      %p176 = scmp.eq.s32.totalorder %s21, 0
      %p177 = por %p175, %p176
      %p178 = scmp.ne.s32.totalorder %s170, %s172
      %p179 = scmp.eq.s32.totalorder %s26, 1
      %p180 = por %p178, %p179
      %p181 = scmp.ne.s32.totalorder %s172, %s173
      %p182 = scmp.eq.s32.totalorder %s26, 0
      %p183 = por %p181, %p182
      %p184 = scmp.ne.s32.totalorder %s172, %s173
      %p185 = scmp.eq.s32.totalorder %s27, 1
      %p186 = por %p184, %p185
      %p188 = scmp.ne.s32.totalorder %s173, %s187
      %p189 = scmp.eq.s32.totalorder %s27, 0
      %p190 = por %p188, %p189
      %p191 = scmp.le.s32.totalorder 1, %s21
      %p192 = scmp.lt.s32.totalorder %s21, 3
      %p193 = pnand %p191, %p192
      %p194 = pneg %p193
      // Predicated region
      $region9: #{tpu_custom_call.1} parent=5 // pred_check
        _
      $region10: #{tpu_custom_call.1} parent=5 // pred_check_branch
        %196 = sbr.rel (%p193) target = $region12
      $region11: #{tpu_custom_call.1} parent=5 // pred_region
        %s197 = ssub.s32 %s21, 1
        // Predicated region
        $region13: #{tpu_custom_call.1} parent=11 // pred_check
          %p198 = pneg %p120
        $region14: #{tpu_custom_call.1} parent=11 // pred_check_branch
          %200 = sbr.rel (%p198) target = $region16
        $region15: #{tpu_custom_call.1} parent=11 // pred_region
          _
        $region16: #{tpu_custom_call.1} parent=11 // pred_fallthru
          _
        // Predicated region
        $region17: #{tpu_custom_call.1} parent=11 // pred_check
          %p201 = pneg %p141
        $region18: #{tpu_custom_call.1} parent=11 // pred_check_branch
          %203 = sbr.rel (%p201) target = $region20
        $region19: #{tpu_custom_call.1} parent=11 // pred_region
          _
        $region20: #{tpu_custom_call.1} parent=11 // pred_fallthru
          _
      $region12: #{tpu_custom_call.1} parent=5 // pred_fallthru
        _
      %p204 = scmp.lt.s32.totalorder %s21, 2
      // Predicated region
      $region21: #{tpu_custom_call.1} parent=5 // pred_check
        %p205 = pneg %p204
      $region22: #{tpu_custom_call.1} parent=5 // pred_check_branch
        %207 = sbr.rel (%p205) target = $region24
      $region23: #{tpu_custom_call.1} parent=5 // pred_region
        // Predicated region
        $region25: #{tpu_custom_call.1} parent=23 // pred_check
          %p208 = pneg %p41
        $region26: #{tpu_custom_call.1} parent=23 // pred_check_branch
          %210 = sbr.rel (%p208) target = $region28
        $region27: #{tpu_custom_call.1} parent=23 // pred_region
          %s211 = sand.u32 %s31, 1
          %s212 = scalar_lea.sflag [#allocation6], %s211
          %s213 = sand.u32 %s31, 1
          %s214 = smul.addr %s213, 8
          %s215 = scalar_lea.vmem [#allocation5], %s214
          %s217 = ssub.s32 128, 128
          %218 = vsyncadd %s212, %s217
          %s219 = smul.addr %s21, 128
          %s220 = scalar_lea.hbm %s0, %s219
          %s222 = sshll.u32 %s215, 4
          %s223 = int_to_ptr.vmem [resolvable:$true] %s222
          %225 = dma.hbm_to_vmem [thread:$0]  %s220, 128, %s223, %s212
        $region28: #{tpu_custom_call.1} parent=23 // pred_fallthru
          _
        // Predicated region
        $region29: #{tpu_custom_call.1} parent=23 // pred_check
          %p226 = pneg %p67
        $region30: #{tpu_custom_call.1} parent=23 // pred_check_branch
          %228 = sbr.rel (%p226) target = $region32
        $region31: #{tpu_custom_call.1} parent=23 // pred_region
          %s229 = sand.u32 %s57, 1
          %s230 = scalar_lea.sflag [#allocation10], %s229
          %s231 = sand.u32 %s57, 1
          %s232 = smul.addr %s231, 8
          %s233 = scalar_lea.vmem [#allocation9], %s232
          %s235 = ssub.s32 128, 128
          %236 = vsyncadd %s230, %s235
          %s237 = smul.addr %s21, 128
          %s238 = scalar_lea.hbm %s1, %s237
          %s240 = sshll.u32 %s233, 4
          %s241 = int_to_ptr.vmem [resolvable:$true] %s240
          %243 = dma.hbm_to_vmem [thread:$0]  %s238, 128, %s241, %s230
        $region32: #{tpu_custom_call.1} parent=23 // pred_fallthru
          _
        // Predicated region
        $region33: #{tpu_custom_call.1} parent=23 // pred_check
          %p244 = pneg %p93
        $region34: #{tpu_custom_call.1} parent=23 // pred_check_branch
          %246 = sbr.rel (%p244) target = $region36
        $region35: #{tpu_custom_call.1} parent=23 // pred_region
          %p247 = scmp.lt.s32.totalorder %s21, 1
          %s248 = scalar_select %p247, %s21, 1
          %s249 = smul.addr %s248, 2
          %s250 = scalar_lea.vmem %s2, %s249
        $region36: #{tpu_custom_call.1} parent=23 // pred_fallthru
          _
      $region24: #{tpu_custom_call.1} parent=5 // pred_fallthru
        _
      %p251 = scmp.le.s32.totalorder 1, %s21
      %p252 = scmp.lt.s32.totalorder %s21, 3
      %p253 = pnand %p251, %p252
      %p254 = pneg %p253
      // Predicated region
      $region37: #{tpu_custom_call.1} parent=5 // pred_check
        _
      $region38: #{tpu_custom_call.1} parent=5 // pred_check_branch
        %256 = sbr.rel (%p253) target = $region40
      $region39: #{tpu_custom_call.1} parent=5 // pred_region
        %s257 = ssub.s32 %s21, 1
        %s258 = sand.u32 %s34, 1
        %s259 = scalar_lea.sflag [#allocation6], %s258
        %s260 = sand.u32 %s34, 1
        %s261 = smul.addr %s260, 8
        %s262 = scalar_lea.vmem [#allocation5], %s261
        // Predicated region
        $region41: #{tpu_custom_call.1} parent=39 // pred_check
          %p263 = pneg %p47
        $region42: #{tpu_custom_call.1} parent=39 // pred_check_branch
          %265 = sbr.rel (%p263) target = $region44
        $region43: #{tpu_custom_call.1} parent=39 // pred_region
          %266 = dma.done %s259, 128
        $region44: #{tpu_custom_call.1} parent=39 // pred_fallthru
          _
        %s267 = sand.u32 %s60, 1
        %s268 = scalar_lea.sflag [#allocation10], %s267
        %s269 = sand.u32 %s60, 1
        %s270 = smul.addr %s269, 8
        %s271 = scalar_lea.vmem [#allocation9], %s270
        // Predicated region
        $region45: #{tpu_custom_call.1} parent=39 // pred_check
          %p272 = pneg %p73
        $region46: #{tpu_custom_call.1} parent=39 // pred_check_branch
          %274 = sbr.rel (%p272) target = $region48
        $region47: #{tpu_custom_call.1} parent=39 // pred_region
          %275 = dma.done %s268, 128
        $region48: #{tpu_custom_call.1} parent=39 // pred_fallthru
          _
        %s276 = sand.u32 %s34, 1
        %s277 = scalar_lea.sflag [#allocation6], %s276
        %s278 = sand.u32 %s34, 1
        %s279 = smul.addr %s278, 8
        %s280 = scalar_lea.vmem [#allocation5], %s279
        %p281 = pneg %p47
        %p282 = pneg %p44
        %s283 = sand.u32 %s60, 1
        %s284 = scalar_lea.sflag [#allocation10], %s283
        %s285 = sand.u32 %s60, 1
        %s286 = smul.addr %s285, 8
        %s287 = scalar_lea.vmem [#allocation9], %s286
        %p288 = pneg %p73
        %p289 = pneg %p70
        %p290 = scmp.lt.s32.totalorder %s26, 1
        %s291 = scalar_select %p290, %s26, 1
        %s292 = smul.addr %s291, 2
        %s293 = scalar_lea.vmem %s2, %s292
        %p294 = pneg %p99
        %p295 = pneg %p96
        %p296 = pneg %p120
        %p297 = pneg %p117
        %p298 = pneg %p141
        %p299 = pneg %p138
        %p300 = pneg %p162
        %p301 = pneg %p159
        %p302 = pneg %p183
        %p303 = pneg %p180
        %p304 = scmp.lt.s32.totalorder %s26, 1
        %s305 = scalar_select %p304, %s26, 1
        %s306 = smul.addr %s305, 2
        %s307 = scalar_lea.vmem %s2, %s306
        %p308 = scmp.eq.s32.totalorder %s26, 0
        // Predicated region
        $region49: #{tpu_custom_call.1} parent=39 // pred_check
          %p309 = pneg %p308
        $region50: #{tpu_custom_call.1} parent=39 // pred_check_branch
          %311 = sbr.rel (%p309) target = $region52
        $region51: #{tpu_custom_call.1} parent=39 // pred_region
          %vm312 = vcmask 5120
          %313 = vst.msk [vmem:[#allocation2] sm:$0x3f] %vm312, 0.0
          %314 = vst.msk [vmem:[#allocation3] sm:$0x3f] %vm312, 0.0
          %vm315 = vcmask 1024
          %316 = vst.msk [vmem:[#allocation4] sm:$0x3] %vm315, 0.0
        $region52: #{tpu_custom_call.1} parent=39 // pred_fallthru
          _
        %v317 = vld [vmem:[#allocation2] sm:$0x3f]
        %v318 = vld [vmem:[%s262] sm:$0x3f]
        %vm319 = vcmask 1045504
        %v320 = vsel %vm319, %v318, 0.0
        %321 = vadd.xlane.f32.xlu0 %v320
        %v322 = vpop.xlane.xlu0 %321
        %v323 = vadd.f32 %v317, %v322
        %vm324 = vcmask 5120
        %325 = vst.msk [vmem:[#allocation2] sm:$0x3f] %vm324, %v323
        %v326 = vld [vmem:[#allocation3] sm:$0x3f]
        %v327 = vld [vmem:[%s271] sm:$0x3f]
        %v328 = vsel %vm319, %v327, 0.0
        %329 = vadd.xlane.f32.xlu0 %v328
        %v330 = vpop.xlane.xlu0 %329
        %v331 = vadd.f32 %v326, %v330
        %332 = vst.msk [vmem:[#allocation3] sm:$0x3f] %vm324, %v331
        %v333 = vld [vmem:[#allocation4] sm:$0x3]
        %v334 = vld [vmem:[%s307] sm:$0x3]
        %vm335 = vcmask 1041408
        %v336 = vsel %vm335, %v334, 0.0
        %337 = vadd.xlane.f32.xlu0 %v336
        %v338 = vpop.xlane.xlu0 %337
        %v339 = vadd.f32 %v333, %v338
        %vm340 = vcmask 1024
        %341 = vst.msk [vmem:[#allocation4] sm:$0x3] %vm340, %v339
        %p342 = scmp.eq.s32.totalorder %s26, 1
        // Predicated region
        $region53: #{tpu_custom_call.1} parent=39 // pred_check
          %p343 = pneg %p342
        $region54: #{tpu_custom_call.1} parent=39 // pred_check_branch
          %345 = sbr.rel (%p343) target = $region56
        $region55: #{tpu_custom_call.1} parent=39 // pred_region
          %v346 = vld [vmem:[%s3] sm:$0x7f]
          %v347 = vld [vmem:[%s4] sm:$0x1]
          %v348 = vld [vmem:[#allocation2] sm:$0x1]
          %s349 = vtos %v348
          %s350 = smul.f32 %s349, 0.00390625
          %v351 = vstv %s350
          %v352 = vmul.f32 %v351, %v346
          %v353 = vadd.f32 %v347, %v352
          %v354 = vld [vmem:[#allocation2 + $0x1] sm:$0x1]
          %s355 = vtos %v354
          %s356 = smul.f32 %s355, 0.00390625
          %v357 = vstv %s356
          %v358 = vmul.f32 %v357, %v346
          %v361 = vunpack.c.l.s4 1966171168
          %v362 = vunpack.c.0.s8 %v361
          %v363 = vlaneseq
          %v364 = vshrl.u32 %v363, 7
          %v365 = vsub.s32 %v362, %v364
          %v366 = vrot.slane %v358, %v365
          %v367 = vcombine.high %v366, %v366
          %v369 = vunpack.c.l.s4 1966171168
          %v370 = vunpack.c.0.s8 %v369
          %v371 = vlaneseq
          %v372 = vshrl.u32 %v371, 7
          %v373 = vsub.s32 %v370, %v372
          %v374 = vrot.slane %v367, %v373
          %v376 = vadd.f32 %v353, %v374
          %v377 = vld [vmem:[#allocation2 + $0x2] sm:$0x1]
          %s378 = vtos %v377
          %s379 = smul.f32 %s378, 0.00390625
          %v380 = vstv %s379
          %v381 = vmul.f32 %v380, %v346
          %v384 = vunpack.c.l.s4 1966171168
          %v385 = vunpack.c.0.s8 %v384
          %v386 = vlaneseq
          %v387 = vshrl.u32 %v386, 7
          %v388 = vsub.s32 %v385, %v387
          %v389 = vrot.slane %v381, %v388
          %v391 = vunpack.c.l.s4 1966171168
          %v392 = vunpack.c.0.s8 %v391
          %v393 = vlaneseq
          %v394 = vshrl.u32 %v393, 7
          %v395 = vsub.s32 %v392, %v394
          %v396 = vrot.slane %v389, %v395
          %v397 = vcombine.high %v396, %v396
          %v399 = vadd.f32 %v376, %v397
          %v400 = vld [vmem:[#allocation3] sm:$0x1]
          %s401 = vtos %v400
          %s402 = smul.f32 %s401, 0.00390625
          %v403 = vstv %s402
          %v404 = vmul.f32 %v403, %v346
          %v407 = vunpack.c.l.s4 1966171168
          %v408 = vunpack.c.0.s8 %v407
          %v409 = vlaneseq
          %v410 = vshrl.u32 %v409, 7
          %v411 = vsub.s32 %v408, %v410
          %v412 = vrot.slane %v404, %v411
          %v413 = vcombine.high %v412, %v412
          %v415 = vunpack.c.l.s4 1966171168
          %v416 = vunpack.c.0.s8 %v415
          %v417 = vlaneseq
          %v418 = vshrl.u32 %v417, 7
          %v419 = vsub.s32 %v416, %v418
          %v420 = vrot.slane %v413, %v419
          %v421 = vcombine.high %v420, %v420
          %v423 = vadd.f32 %v399, %v421
          %v424 = vld [vmem:[#allocation3 + $0x1] sm:$0x1]
          %s425 = vtos %v424
          %s426 = smul.f32 %s425, 0.00390625
          %v427 = vstv %s426
          %v428 = vmul.f32 %v427, %v346
          %v430 = vcombine.high %v428, %v428
          %v432 = vunpack.c.l.s4 1966171168
          %v433 = vunpack.c.0.s8 %v432
          %v434 = vlaneseq
          %v435 = vshrl.u32 %v434, 7
          %v436 = vsub.s32 %v433, %v435
          %v437 = vrot.slane %v430, %v436
          %v439 = vunpack.c.l.s4 1966171168
          %v440 = vunpack.c.0.s8 %v439
          %v441 = vlaneseq
          %v442 = vshrl.u32 %v441, 7
          %v443 = vsub.s32 %v440, %v442
          %v444 = vrot.slane %v437, %v443
          %v446 = vadd.f32 %v423, %v444
          %v447 = vld [vmem:[#allocation3 + $0x2] sm:$0x1]
          %s448 = vtos %v447
          %s449 = smul.f32 %s448, 0.00390625
          %v450 = vstv %s449
          %v451 = vmul.f32 %v450, %v346
          %v453 = vcombine.high %v451, %v451
          %v455 = vunpack.c.l.s4 1966171168
          %v456 = vunpack.c.0.s8 %v455
          %v457 = vlaneseq
          %v458 = vshrl.u32 %v457, 7
          %v459 = vsub.s32 %v456, %v458
          %v460 = vrot.slane %v453, %v459
          %v461 = vcombine.high %v460, %v460
          %v463 = vunpack.c.l.s4 1966171168
          %v464 = vunpack.c.0.s8 %v463
          %v465 = vlaneseq
          %v466 = vshrl.u32 %v465, 7
          %v467 = vsub.s32 %v464, %v466
          %v468 = vrot.slane %v461, %v467
          %v470 = vadd.f32 %v446, %v468
          %v471 = vld [vmem:[#allocation4] sm:$0x1]
          %s472 = vtos %v471
          %s473 = smul.f32 %s472, 0.00390625
          %v474 = vstv %s473
          %v475 = vmul.f32 %v474, %v346
          %v477 = vcombine.high %v475, %v475
          %v479 = vunpack.c.l.s4 1966171168
          %v480 = vunpack.c.0.s8 %v479
          %v481 = vlaneseq
          %v482 = vshrl.u32 %v481, 7
          %v483 = vsub.s32 %v480, %v482
          %v484 = vrot.slane %v477, %v483
          %v486 = vunpack.c.l.s4 1966171168
          %v487 = vunpack.c.0.s8 %v486
          %v488 = vlaneseq
          %v489 = vshrl.u32 %v488, 7
          %v490 = vsub.s32 %v487, %v489
          %v491 = vrot.slane %v484, %v490
          %v492 = vcombine.high %v491, %v491
          %v494 = vadd.f32 %v470, %v492
          %vm495 = vcmask 24576
          %v496 = vsel %vm495, %v494, -inf
          %497 = vmax.xlane.f32.xlu0 %v496
          %v498 = vpop.xlane.xlu0 %497
          %v499 = vrot.slane %v498, 4
          %v500 = vmax.f32 %v498, %v499
          %v501 = vrot.slane %v500, 2
          %v502 = vmax.f32 %v500, %v501
          %v503 = vrot.slane %v502, 1
          %v504 = vmax.f32 %v502, %v503
          %s505 = vtos %v504
          %v506 = vstv %s505
          %v507 = vsub.f32 %v494, %v506
          %v508 = vmul.f32 %v507, 1.442695
          %v509 = vpow.pop %v508
          %v510 = vsel %vm495, %v509, 0.0
          %511 = vadd.xlane.f32.xlu0 %v510
          %v512 = vpop.xlane.xlu0 %511
          %v513 = vrot.slane %v512, 4
          %v514 = vadd.f32 %v512, %v513
          %v515 = vrot.slane %v514, 2
          %v516 = vadd.f32 %v514, %v515
          %v517 = vrot.slane %v516, 1
          %v518 = vadd.f32 %v516, %v517
          %s519 = vtos %v518
          %v520 = vstv %s519
          %v521 = vrcp.pop %v520
          %v522 = vmul.f32 %v509, %v521
          %523 = vst.msk [vmem:[#allocation11] sm:$0x1] %vm495, %v522
          %v524 = vsel %vm495, %v522, -inf
          %525 = vmax.xlane.f32.xlu0 %v524
          %v526 = vpop.xlane.xlu0 %525
          %v527 = vrot.slane %v526, 4
          %v528 = vmax.f32 %v526, %v527
          %v529 = vrot.slane %v528, 2
          %v530 = vmax.f32 %v528, %v529
          %v531 = vrot.slane %v530, 1
          %v532 = vmax.f32 %v530, %v531
          %s533 = vtos %v532
          %v534 = vlaneseq
          %v535 = vand.u32 %v534, 127
          %v536 = vstv %s533
          %vm537 = vcmp.ge.f32.partialorder %v522, %v536
          %v538 = vsel %vm537, %v535, 4
          %v539 = vsel %vm495, %v538, 2147483647
          %v540 = vand.u32 %v539, 65535
          %v541 = vshra.s32 %v539, 16
          %v542 = vcvt.s32.f32 %v540
          %v543 = vcvt.s32.f32 %v541
          %544 = vmin.xlane.f32.xlu0 %v543
          %v545 = vpop.xlane.xlu0 %544
          %vm546 = vcmp.eq.f32.partialorder %v543, %v545
          %v547 = vsel %vm546, %v542, inf
          %548 = vmin.xlane.f32.xlu0 %v547
          %v549 = vpop.xlane.xlu0 %548
          %v550 = vcvt.f32.s32 %v549
          %v551 = vcvt.f32.s32 %v545
          %v552 = vshll.u32 %v551, 16
          %v553 = vadd.s32 %v552, %v550
          %v554 = vrot.slane %v553, 4
          %vm555 = vcmp.lt.s32.totalorder %v553, %v554
          %v556 = vsel %vm555, %v553, %v554
          %v557 = vrot.slane %v556, 2
          %vm558 = vcmp.lt.s32.totalorder %v556, %v557
          %v559 = vsel %vm558, %v556, %v557
          %v560 = vrot.slane %v559, 1
          %vm561 = vcmp.lt.s32.totalorder %v559, %v560
          %v562 = vsel %vm561, %v559, %v560
          %s563 = vtos %v562
          %p564 = scmp.gt.f32.partialorder %s533, -inf
          %s565 = scalar_select %p564, %s563, 0
          %s566 = scalar_select %p564, %s533, -inf
          %v567 = vld [vmem:[#allocation2 + $0x3] sm:$0x1]
          %s568 = vtos %v567
          %s569 = smul.f32 %s568, 0.00390625
          %v570 = vstv %s569
          %v571 = vmul.f32 %v570, %v346
          %v572 = vadd.f32 %v347, %v571
          %v573 = vld [vmem:[#allocation2 + $0x4] sm:$0x1]
          %s574 = vtos %v573
          %s575 = smul.f32 %s574, 0.00390625
          %v576 = vstv %s575
          %v577 = vmul.f32 %v576, %v346
          %v580 = vunpack.c.l.s4 1966171168
          %v581 = vunpack.c.0.s8 %v580
          %v582 = vlaneseq
          %v583 = vshrl.u32 %v582, 7
          %v584 = vsub.s32 %v581, %v583
          %v585 = vrot.slane %v577, %v584
          %v586 = vcombine.high %v585, %v585
          %v588 = vunpack.c.l.s4 1966171168
          %v589 = vunpack.c.0.s8 %v588
          %v590 = vlaneseq
          %v591 = vshrl.u32 %v590, 7
          %v592 = vsub.s32 %v589, %v591
          %v593 = vrot.slane %v586, %v592
          %v595 = vadd.f32 %v572, %v593
          %v596 = vld [vmem:[#allocation2 + $0x5] sm:$0x1]
          %s597 = vtos %v596
          %s598 = smul.f32 %s597, 0.00390625
          %v599 = vstv %s598
          %v600 = vmul.f32 %v599, %v346
          %v603 = vunpack.c.l.s4 1966171168
          %v604 = vunpack.c.0.s8 %v603
          %v605 = vlaneseq
          %v606 = vshrl.u32 %v605, 7
          %v607 = vsub.s32 %v604, %v606
          %v608 = vrot.slane %v600, %v607
          %v610 = vunpack.c.l.s4 1966171168
          %v611 = vunpack.c.0.s8 %v610
          %v612 = vlaneseq
          %v613 = vshrl.u32 %v612, 7
          %v614 = vsub.s32 %v611, %v613
          %v615 = vrot.slane %v608, %v614
          %v616 = vcombine.high %v615, %v615
          %v618 = vadd.f32 %v595, %v616
          %v619 = vld [vmem:[#allocation3 + $0x3] sm:$0x1]
          %s620 = vtos %v619
          %s621 = smul.f32 %s620, 0.00390625
          %v622 = vstv %s621
          %v623 = vmul.f32 %v622, %v346
          %v626 = vunpack.c.l.s4 1966171168
          %v627 = vunpack.c.0.s8 %v626
          %v628 = vlaneseq
          %v629 = vshrl.u32 %v628, 7
          %v630 = vsub.s32 %v627, %v629
          %v631 = vrot.slane %v623, %v630
          %v632 = vcombine.high %v631, %v631
          %v634 = vunpack.c.l.s4 1966171168
          %v635 = vunpack.c.0.s8 %v634
          %v636 = vlaneseq
          %v637 = vshrl.u32 %v636, 7
          %v638 = vsub.s32 %v635, %v637
          %v639 = vrot.slane %v632, %v638
          %v640 = vcombine.high %v639, %v639
          %v642 = vadd.f32 %v618, %v640
          %v643 = vld [vmem:[#allocation3 + $0x4] sm:$0x1]
          %s644 = vtos %v643
          %s645 = smul.f32 %s644, 0.00390625
          %v646 = vstv %s645
          %v647 = vmul.f32 %v646, %v346
          %v649 = vcombine.high %v647, %v647
          %v651 = vunpack.c.l.s4 1966171168
          %v652 = vunpack.c.0.s8 %v651
          %v653 = vlaneseq
          %v654 = vshrl.u32 %v653, 7
          %v655 = vsub.s32 %v652, %v654
          %v656 = vrot.slane %v649, %v655
          %v658 = vunpack.c.l.s4 1966171168
          %v659 = vunpack.c.0.s8 %v658
          %v660 = vlaneseq
          %v661 = vshrl.u32 %v660, 7
          %v662 = vsub.s32 %v659, %v661
          %v663 = vrot.slane %v656, %v662
          %v665 = vadd.f32 %v642, %v663
          %v666 = vld [vmem:[#allocation3 + $0x5] sm:$0x1]
          %s667 = vtos %v666
          %s668 = smul.f32 %s667, 0.00390625
          %v669 = vstv %s668
          %v670 = vmul.f32 %v669, %v346
          %v672 = vcombine.high %v670, %v670
          %v674 = vunpack.c.l.s4 1966171168
          %v675 = vunpack.c.0.s8 %v674
          %v676 = vlaneseq
          %v677 = vshrl.u32 %v676, 7
          %v678 = vsub.s32 %v675, %v677
          %v679 = vrot.slane %v672, %v678
          %v680 = vcombine.high %v679, %v679
          %v682 = vunpack.c.l.s4 1966171168
          %v683 = vunpack.c.0.s8 %v682
          %v684 = vlaneseq
          %v685 = vshrl.u32 %v684, 7
          %v686 = vsub.s32 %v683, %v685
          %v687 = vrot.slane %v680, %v686
          %v689 = vadd.f32 %v665, %v687
          %v690 = vld [vmem:[#allocation4 + $0x1] sm:$0x1]
          %s691 = vtos %v690
          %s692 = smul.f32 %s691, 0.00390625
          %v693 = vstv %s692
          %v694 = vmul.f32 %v693, %v346
          %v696 = vcombine.high %v694, %v694
          %v698 = vunpack.c.l.s4 1966171168
          %v699 = vunpack.c.0.s8 %v698
          %v700 = vlaneseq
          %v701 = vshrl.u32 %v700, 7
          %v702 = vsub.s32 %v699, %v701
          %v703 = vrot.slane %v696, %v702
          %v705 = vunpack.c.l.s4 1966171168
          %v706 = vunpack.c.0.s8 %v705
          %v707 = vlaneseq
          %v708 = vshrl.u32 %v707, 7
          %v709 = vsub.s32 %v706, %v708
          %v710 = vrot.slane %v703, %v709
          %v711 = vcombine.high %v710, %v710
          %v713 = vadd.f32 %v689, %v711
          %v714 = vsel %vm495, %v713, -inf
          %715 = vmax.xlane.f32.xlu0 %v714
          %v716 = vpop.xlane.xlu0 %715
          %v717 = vrot.slane %v716, 4
          %v718 = vmax.f32 %v716, %v717
          %v719 = vrot.slane %v718, 2
          %v720 = vmax.f32 %v718, %v719
          %v721 = vrot.slane %v720, 1
          %v722 = vmax.f32 %v720, %v721
          %s723 = vtos %v722
          %v724 = vstv %s723
          %v725 = vsub.f32 %v713, %v724
          %v726 = vmul.f32 %v725, 1.442695
          %v727 = vpow.pop %v726
          %v728 = vsel %vm495, %v727, 0.0
          %729 = vadd.xlane.f32.xlu0 %v728
          %v730 = vpop.xlane.xlu0 %729
          %v731 = vrot.slane %v730, 4
          %v732 = vadd.f32 %v730, %v731
          %v733 = vrot.slane %v732, 2
          %v734 = vadd.f32 %v732, %v733
          %v735 = vrot.slane %v734, 1
          %v736 = vadd.f32 %v734, %v735
          %s737 = vtos %v736
          %v738 = vstv %s737
          %v739 = vrcp.pop %v738
          %v740 = vmul.f32 %v727, %v739
          %741 = vst.msk [vmem:[#allocation11 + $0x1] sm:$0x1] %vm495, %v740
          %v742 = vsel %vm495, %v740, -inf
          %743 = vmax.xlane.f32.xlu0 %v742
          %v744 = vpop.xlane.xlu0 %743
          %v745 = vrot.slane %v744, 4
          %v746 = vmax.f32 %v744, %v745
          %v747 = vrot.slane %v746, 2
          %v748 = vmax.f32 %v746, %v747
          %v749 = vrot.slane %v748, 1
          %v750 = vmax.f32 %v748, %v749
          %s751 = vtos %v750
          %v752 = vstv %s751
          %vm753 = vcmp.ge.f32.partialorder %v740, %v752
          %v754 = vsel %vm753, %v535, 4
          %v755 = vsel %vm495, %v754, 2147483647
          %v756 = vand.u32 %v755, 65535
          %v757 = vshra.s32 %v755, 16
          %v758 = vcvt.s32.f32 %v756
          %v759 = vcvt.s32.f32 %v757
          %760 = vmin.xlane.f32.xlu0 %v759
          %v761 = vpop.xlane.xlu0 %760
          %vm762 = vcmp.eq.f32.partialorder %v759, %v761
          %v763 = vsel %vm762, %v758, inf
          %764 = vmin.xlane.f32.xlu0 %v763
          %v765 = vpop.xlane.xlu0 %764
          %v766 = vcvt.f32.s32 %v765
          %v767 = vcvt.f32.s32 %v761
          %v768 = vshll.u32 %v767, 16
          %v769 = vadd.s32 %v768, %v766
          %v770 = vrot.slane %v769, 4
          %vm771 = vcmp.lt.s32.totalorder %v769, %v770
          %v772 = vsel %vm771, %v769, %v770
          %v773 = vrot.slane %v772, 2
          %vm774 = vcmp.lt.s32.totalorder %v772, %v773
          %v775 = vsel %vm774, %v772, %v773
          %v776 = vrot.slane %v775, 1
          %vm777 = vcmp.lt.s32.totalorder %v775, %v776
          %v778 = vsel %vm777, %v775, %v776
          %s779 = vtos %v778
          %s780 = sadd.s32 %s779, 4
          %p781 = scmp.gt.f32.partialorder %s751, %s566
          %s782 = scalar_select %p781, %s780, %s565
          %s783 = scalar_lea.smem [#allocation12], 0
          %784 = sst [smem:[%s783]] %s782
        $region56: #{tpu_custom_call.1} parent=39 // pred_fallthru
          _
        // Predicated region
        $region57: #{tpu_custom_call.1} parent=39 // pred_check
          %p785 = pneg %p159
        $region58: #{tpu_custom_call.1} parent=39 // pred_check_branch
          %787 = sbr.rel (%p785) target = $region60
        $region59: #{tpu_custom_call.1} parent=39 // pred_region
          %s789 = ssub.s32 32, 32
          %790 = vsyncadd [#allocation7], %s789
          %s792 = sshll.u32 [#allocation11], 4
          %s793 = int_to_ptr.vmem [resolvable:$true] %s792
          %795 = dma.vmem_to_hbm [thread:$0]  %s793, 32, %s5, [#allocation7]
        $region60: #{tpu_custom_call.1} parent=39 // pred_fallthru
          _
        // Predicated region
        $region61: #{tpu_custom_call.1} parent=39 // pred_check
          %p796 = pneg %p180
        $region62: #{tpu_custom_call.1} parent=39 // pred_check_branch
          %798 = sbr.rel (%p796) target = $region64
        $region63: #{tpu_custom_call.1} parent=39 // pred_region
          %s800 = ssub.s32 16, 16
          %801 = vsyncadd [#allocation8], %s800
          %804 = dma.smem_to_hbm [#allocation12], 16, %s6, [#allocation8]
        $region64: #{tpu_custom_call.1} parent=39 // pred_fallthru
          _
        // Predicated region
        $region65: #{tpu_custom_call.1} parent=39 // pred_check
          %p805 = pneg %p159
        $region66: #{tpu_custom_call.1} parent=39 // pred_check_branch
          %807 = sbr.rel (%p805) target = $region68
        $region67: #{tpu_custom_call.1} parent=39 // pred_region
          %808 = dma.done [#allocation7], 32
        $region68: #{tpu_custom_call.1} parent=39 // pred_fallthru
          _
        // Predicated region
        $region69: #{tpu_custom_call.1} parent=39 // pred_check
          %p809 = pneg %p180
        $region70: #{tpu_custom_call.1} parent=39 // pred_check_branch
          %811 = sbr.rel (%p809) target = $region72
        $region71: #{tpu_custom_call.1} parent=39 // pred_region
          %812 = dma.done [#allocation8], 16
        $region72: #{tpu_custom_call.1} parent=39 // pred_fallthru
          _
        %813 = sfence
      $region40: #{tpu_custom_call.1} parent=5 // pred_fallthru
        _
      %p814 = scmp.le.s32.totalorder 2, %s21
      // Predicated region
      $region73: #{tpu_custom_call.1} parent=5 // pred_check
        %p815 = pneg %p814
      $region74: #{tpu_custom_call.1} parent=5 // pred_check_branch
        %817 = sbr.rel (%p815) target = $region76
      $region75: #{tpu_custom_call.1} parent=5 // pred_region
        %s818 = ssub.s32 %s21, 2
      $region76: #{tpu_custom_call.1} parent=5 // pred_fallthru
        _
    $region6: #{tpu_custom_call.1} parent=1 // loop_footer
      %s25 = sadd.s32 1, %s21
    $region7: #{tpu_custom_call.1} parent=1 // loop_footer_branch
      %20 = sbr.rel target = $region3
    $region8: #{tpu_custom_call.1} parent=1 // loop_exit
      _
    %819 = vsyncpa [#allocation6], 1
    %s820 = scalar_lea.sflag [#allocation6], 1
    %821 = vsyncpa %s820, 1
    %822 = vsyncpa [#allocation10], 1
    %s823 = scalar_lea.sflag [#allocation10], 1
    %824 = vsyncpa %s823, 1
    %825 = vsyncpa [#allocation7], 1
    %s826 = scalar_lea.sflag [#allocation7], 1
    %827 = vsyncpa %s826, 1
    %828 = vsyncpa [#allocation8], 1
    %s829 = scalar_lea.sflag [#allocation8], 1
    %830 = vsyncpa %s829, 1

</llo_original>
